<compile_context>
chip_gen: v5e
topology: v5e:2x2
jax: 0.10.0
libtpu: 0.0.40
codegen_flags: <defaults>
</compile_context>

<pallas_src>
import functools
import math

import jax
import jax.numpy as jnp
from jax import lax
from jax.experimental import pallas as pl
from jax.experimental.pallas import tpu as pltpu


# ------------------------------- helpers -----------------------------------


def _round_up(x, m):
    return ((x + m - 1) // m) * m


def _sublane_align(dtype):
    # Sublane packing: f32 -> 8 rows, bf16 -> 16, int8/fp8 -> 32.
    itemsize = jnp.dtype(dtype).itemsize
    return {4: 8, 2: 16, 1: 32}.get(itemsize, 8)


def _vmem_budget_bytes():
    """Generation-aware VMEM budget with headroom for compiler scratch."""
    try:
        cap = int(pltpu.get_tpu_info().vmem_capacity_bytes)
    except Exception:
        cap = 64 << 20  # conservative fallback = v7x physical VMEM per TC
    return (cap * 3) // 4


def _pick_dim_tile(padded, cap):
    """Largest tile <= cap that divides `padded` (which is a 128-multiple).

    Returns the full dim if it fits; otherwise prefers 256-aligned tiles
    (v6e/v7x MXU is 2x256x256) over plain 128-multiples.
    """
    if padded <= cap:
        return padded
    best128, best256 = 128, 0
    d = 128
    while d <= cap:
        if padded % d == 0:
            best128 = d
            if d % 256 == 0:
                best256 = d
        d += 128
    return best256 if best256 >= 256 else best128


def _working_set_bytes(tm, tk, tn, x_dtype, w_dtype, out_dtype, multi_k):
    xb = tm * tk * jnp.dtype(x_dtype).itemsize
    wb = tk * tn * jnp.dtype(w_dtype).itemsize
    ob = tm * tn * jnp.dtype(out_dtype).itemsize
    bb = tn * 4  # bias row (f32)
    acc = tm * tn * 4 if multi_k else 0
    return 2 * (xb + wb + ob + bb) + acc  # double-buffered ins/outs + scratch


def _pick_tiles(M, K_p, N_p, x_dtype, w_dtype, out_dtype):
    budget = _vmem_budget_bytes()
    align_m = _sublane_align(out_dtype)

    if M <= 16:
        # Decode: weight-bandwidth bound.  Wide N/K tiles stream large
        # contiguous weight slabs and amortize the ~0.35 us/step overhead.
        # (A deeper weight pipeline, pipeline_mode=pl.Buffered(3), is a
        #  further option here if DMA is still exposed.)
        tm = _round_up(max(M, 1), align_m)
        tn_cap, tk_cap = 2048, 1024
    elif M <= 512:
        tm = _round_up(M, align_m)
        tn_cap, tk_cap = 1024, 512
    else:
        tm = 512
        tn_cap, tk_cap = 1024, 512

    while True:
        tn = _pick_dim_tile(N_p, tn_cap)
        tk = _pick_dim_tile(K_p, tk_cap)
        # v7x has 2 TensorCores: for small M keep >=2 blocks along the
        # parallel N axis so one core doesn't idle.
        if M <= 16 and N_p // tn < 2 and N_p >= 256:
            tn = _pick_dim_tile(N_p, max(N_p // 2, 128))
        ws = _working_set_bytes(tm, tk, tn, x_dtype, w_dtype, out_dtype,
                                multi_k=(K_p // tk) > 1)
        if ws <= budget or (tn_cap <= 128 and tk_cap <= 128):
            break
        tn_cap = max(tn_cap // 2, 128)
        tk_cap = max(tk_cap // 2, 128)

    return tm, tk, tn, ws, budget


# ------------------------------- kernels ------------------------------------
# Weight is pre-packed to (K_p, N_p); contraction is the native (tm,tk)x(tk,tn).


def _mm_kernel_acc_bias(x_ref, w_ref, b_ref, o_ref, acc_ref, *, precision):
    k = pl.program_id(2)

    @pl.when(k == 0)
    def _():
        acc_ref[...] = jnp.zeros_like(acc_ref)

    acc_ref[...] += jnp.dot(x_ref[...], w_ref[...],
                            preferred_element_type=jnp.float32,
                            precision=precision)

    @pl.when(k == pl.num_programs(2) - 1)
    def _():
        o_ref[...] = (acc_ref[...] + b_ref[...].astype(jnp.float32)).astype(o_ref.dtype)


def _mm_kernel_acc_nobias(x_ref, w_ref, o_ref, acc_ref, *, precision):
    k = pl.program_id(2)

    @pl.when(k == 0)
    def _():
        acc_ref[...] = jnp.zeros_like(acc_ref)

    acc_ref[...] += jnp.dot(x_ref[...], w_ref[...],
                            preferred_element_type=jnp.float32,
                            precision=precision)

    @pl.when(k == pl.num_programs(2) - 1)
    def _():
        o_ref[...] = acc_ref[...].astype(o_ref.dtype)


def _mm_kernel_single_bias(x_ref, w_ref, b_ref, o_ref, *, precision):
    acc = jnp.dot(x_ref[...], w_ref[...],
                  preferred_element_type=jnp.float32, precision=precision)
    o_ref[...] = (acc + b_ref[...].astype(jnp.float32)).astype(o_ref.dtype)


def _mm_kernel_single_nobias(x_ref, w_ref, o_ref, *, precision):
    acc = jnp.dot(x_ref[...], w_ref[...],
                  preferred_element_type=jnp.float32, precision=precision)
    o_ref[...] = acc.astype(o_ref.dtype)


# ------------------------------- packing ------------------------------------


def pack_linear_params(weight, bias=None, compute_dtype=None):
    """One-time per-parameter packing (hoist out of the forward pass):
      * transpose W (out,in) -> (in,out): native MXU RHS layout, no per-tile
        transposes in the k-loop,
      * zero-pad in/out features to 128-lane multiples ONCE (not per call),
      * optionally cast to a lower-precision compute dtype (e.g. bf16 to run
        the MXU at full rate; accumulation stays f32 in-kernel).
    """
    out_features, in_features = weight.shape
    K_p = _round_up(in_features, 128)
    N_p = _round_up(out_features, 128)

    w = weight.T  # (K, N) -- one-time transpose of a constant parameter
    if (K_p, N_p) != (in_features, out_features):
        w = jnp.pad(w, ((0, K_p - in_features), (0, N_p - out_features)))
    if compute_dtype is not None:
        w = w.astype(compute_dtype)

    b = None
    if bias is not None:
        b = bias.reshape(1, out_features).astype(jnp.float32)
        if N_p != out_features:
            b = jnp.pad(b, ((0, 0), (0, N_p - out_features)))

    return dict(w_packed=w, b_packed=b,
                in_features=in_features, out_features=out_features,
                compute_dtype=compute_dtype)


# ------------------------------- forward ------------------------------------


def linear_forward(x, params, *, precision=None, tile_override=None):
    """y = x @ W.T (+ b), matching torch.nn.functional.linear semantics.

    `params` comes from pack_linear_params (weight padded/transposed once).
    `precision`: pass lax.Precision.HIGHEST for bit-accurate f32 matmul.
    """
    w = params["w_packed"]
    b = params["b_packed"]
    K = params["in_features"]
    N = params["out_features"]
    K_p, N_p = w.shape
    assert x.shape[-1] == K

    lead_shape = x.shape[:-1]
    M = int(math.prod(lead_shape)) if lead_shape else 1
    out_dtype = x.dtype

    x2d = x.reshape(M, K)
    if params["compute_dtype"] is not None:
        x2d = x2d.astype(params["compute_dtype"])

    if tile_override is not None:
        tm, tk, tn = tile_override
        assert K_p % tk == 0 and N_p % tn == 0
        budget = _vmem_budget_bytes()
        ws = _working_set_bytes(tm, tk, tn, x2d.dtype, w.dtype, out_dtype,
                                multi_k=(K_p // tk) > 1)
    else:
        tm, tk, tn, ws, budget = _pick_tiles(M, K_p, N_p, x2d.dtype, w.dtype,
                                             out_dtype)

    # Only the activation may still need padding (usually just the ragged K
    # tail and a few M rows -- much cheaper than re-padding W every call).
    M_p = _round_up(M, tm)
    if (M_p, K_p) != (M, K):
        x2d = jnp.pad(x2d, ((0, M_p - M), (0, K_p - K)))

    nm, nn, nk = M_p // tm, N_p // tn, K_p // tk

    xi = jnp.dtype(x2d.dtype).itemsize
    wi = jnp.dtype(w.dtype).itemsize
    oi = jnp.dtype(out_dtype).itemsize
    cost = pl.CostEstimate(
        flops=2 * M_p * N_p * K_p,
        transcendentals=0,
        bytes_accessed=(nn * M_p * K_p * xi      # x re-streamed per N block
                        + nm * K_p * N_p * wi    # W re-streamed per M block
                        + M_p * N_p * oi),
    )
    vmem_limit = int(min(budget, max(2 * ws, 32 << 20)))
    out_shape = jax.ShapeDtypeStruct((M_p, N_p), out_dtype)

    if nk == 1:
        # Single K step: no accumulator scratch, no init/epilogue predication.
        grid = (nm, nn)
        x_spec = pl.BlockSpec((tm, tk), lambda i, j: (i, 0))
        w_spec = pl.BlockSpec((tk, tn), lambda i, j: (0, j))
        o_spec = pl.BlockSpec((tm, tn), lambda i, j: (i, j))
        sem = ("parallel", "parallel")
        scratch = []
        if b is not None:
            b_spec = pl.BlockSpec((1, tn), lambda i, j: (0, j))
            kernel = functools.partial(_mm_kernel_single_bias, precision=precision)
            in_specs = [x_spec, w_spec, b_spec]
            operands = (x2d, w, b)
        else:
            kernel = functools.partial(_mm_kernel_single_nobias, precision=precision)
            in_specs = [x_spec, w_spec]
            operands = (x2d, w)
    else:
        grid = (nm, nn, nk)
        x_spec = pl.BlockSpec((tm, tk), lambda i, j, k: (i, k))
        w_spec = pl.BlockSpec((tk, tn), lambda i, j, k: (k, j))
        o_spec = pl.BlockSpec((tm, tn), lambda i, j, k: (i, j))
        sem = ("parallel", "parallel", "arbitrary")
        scratch = [pltpu.VMEM((tm, tn), jnp.float32)]
        if b is not None:
            b_spec = pl.BlockSpec((1, tn), lambda i, j, k: (0, j))
            kernel = functools.partial(_mm_kernel_acc_bias, precision=precision)
            in_specs = [x_spec, w_spec, b_spec]
            operands = (x2d, w, b)
        else:
            kernel = functools.partial(_mm_kernel_acc_nobias, precision=precision)
            in_specs = [x_spec, w_spec]
            operands = (x2d, w)

    out2d = pl.pallas_call(
        kernel,
        out_shape=out_shape,
        grid=grid,
        in_specs=in_specs,
        out_specs=o_spec,
        scratch_shapes=scratch,
        compiler_params=pltpu.CompilerParams(
            dimension_semantics=sem,
            vmem_limit_bytes=vmem_limit,
        ),
        cost_estimate=cost,
    )(*operands)

    out2d = out2d[:M, :N]
    return out2d.reshape(*lead_shape, N)


def linear(x, weight, bias=None, **kwargs):
    """Convenience wrapper; for repeated calls hoist pack_linear_params out."""
    return linear_forward(x, pack_linear_params(weight, bias), **kwargs)


# ----------------------------- param init -----------------------------------


def init_linear_params(key, in_features, out_features, bias=True):
    """Mirror Linear.reset_parameters(): kaiming_uniform_(a=sqrt(5)) on weight
    => U(-1/sqrt(fan_in), 1/sqrt(fan_in)); same bound for bias."""
    kw, kb = jax.random.split(key)
    fan_in = in_features
    bound = 1.0 / math.sqrt(fan_in) if fan_in > 0 else 0.0
    weight = jax.random.uniform(
        kw, (out_features, in_features), jnp.float32, minval=-bound, maxval=bound
    )
    b = None
    if bias:
        b = jax.random.uniform(
            kb, (out_features,), jnp.float32, minval=-bound, maxval=bound
        )
    return weight, b


# --------------------------------- demo -------------------------------------


if __name__ == "__main__":
    key = jax.random.PRNGKey(0)
    k_x, k_p, k_x2, k_p2 = jax.random.split(key, 4)

    # Small shapes consistent with Linear.forward: (batch, seq, in) @ W.T + b
    batch, seq, in_features, out_features = 2, 8, 32, 16
    x = jax.random.normal(k_x, (batch, seq, in_features), jnp.float32)
    weight, bias = init_linear_params(k_p, in_features, out_features, bias=True)

    params = pack_linear_params(weight, bias)          # one-time weight packing
    y = jax.block_until_ready(linear_forward(x, params))
    y_ref = x @ weight.T + bias
    assert y.shape == (batch, seq, out_features)
    # MXU f32 matmul at default precision is near-f32 but not guaranteed
    # bit-exact; tolerance still rejects structural errors (tiling/bias/transpose).
    assert jnp.allclose(y, y_ref, atol=1e-2, rtol=1e-2), float(
        jnp.max(jnp.abs(y - y_ref)))

    # bias=False path.
    params_nb = pack_linear_params(weight, None)
    y_nb = jax.block_until_ready(linear_forward(x, params_nb))
    assert jnp.allclose(y_nb, x @ weight.T, atol=1e-2, rtol=1e-2)

    # Exercise the multi-K-step accumulator kernel: force small tiles so the
    # K grid axis has >1 step even at small shapes.
    in2, out2 = 256, 48
    x2 = jax.random.normal(k_x2, (batch, seq, in2), jnp.float32)
    w2, b2 = init_linear_params(k_p2, in2, out2, bias=True)
    p2 = pack_linear_params(w2, b2)
    y2 = jax.block_until_ready(linear_forward(x2, p2, tile_override=(16, 128, 128)))
    y2_ref = x2 @ w2.T + b2
    assert jnp.allclose(y2, y2_ref, atol=1e-2, rtol=1e-2), float(
        jnp.max(jnp.abs(y2 - y2_ref)))

    print("KERNEL_OK")
</pallas_src>

<mosaic_0001>
module attributes {stable_mosaic.version = 11 : i64} {
  func.func @_mm_kernel_single_bias(%arg0: i32, %arg1: i32, %arg2: memref<16x128xf32, #tpu.memory_space<vmem>>, %arg3: memref<128x128xf32, #tpu.memory_space<vmem>>, %arg4: memref<1x128xf32, #tpu.memory_space<vmem>>, %arg5: memref<16x128xf32, #tpu.memory_space<vmem>>) attributes {dimension_semantics = [#tpu.dimension_semantics<parallel>, #tpu.dimension_semantics<parallel>], iteration_bounds = array<i64: 1, 1>, scalar_prefetch = 0 : i64, scratch_operands = 0 : i64, tpu.core_type = #tpu.core_type<tc>, window_params = [{transform_indices = @transform_0, window_bounds = array<i64: 16, 128>}, {transform_indices = @transform_1, window_bounds = array<i64: 128, 128>}, {transform_indices = @transform_2, window_bounds = array<i64: 1, 128>}, {transform_indices = @transform_3, window_bounds = array<i64: 16, 128>}]} {
    %c0 = arith.constant 0 : index
    %c0_0 = arith.constant 0 : index
    %0 = vector.load %arg2[%c0, %c0_0] : memref<16x128xf32, #tpu.memory_space<vmem>>, vector<16x128xf32>
    %c0_1 = arith.constant 0 : index
    %c0_2 = arith.constant 0 : index
    %1 = vector.load %arg3[%c0_1, %c0_2] : memref<128x128xf32, #tpu.memory_space<vmem>>, vector<128x128xf32>
    %cst = arith.constant dense<0.000000e+00> : vector<16x128xf32>
    %2 = tpu.matmul %0, %1, %cst {dimension_numbers = #tpu.dot_dimension_numbers<[1], [0], [0], [1], [0, 0, 1, 1], [], []>} : vector<16x128xf32>, vector<128x128xf32>, vector<16x128xf32> -> vector<16x128xf32>
    %c0_3 = arith.constant 0 : index
    %c0_4 = arith.constant 0 : index
    %3 = vector.load %arg4[%c0_3, %c0_4] : memref<1x128xf32, #tpu.memory_space<vmem>>, vector<1x128xf32>
    %4 = vector.broadcast %3 : vector<1x128xf32> to vector<16x128xf32>
    %5 = arith.addf %2, %4 : vector<16x128xf32>
    %c0_5 = arith.constant 0 : index
    %c0_6 = arith.constant 0 : index
    %6 = vector.load %arg5[%c0_5, %c0_6] : memref<16x128xf32, #tpu.memory_space<vmem>>, vector<16x128xf32>
    tpu.vector_store %arg5[%c0_5, %c0_6], %5 {strides = array<i32>} : memref<16x128xf32, #tpu.memory_space<vmem>>, vector<16x128xf32>,
    return
  }
  func.func @transform_0(%arg0: i32, %arg1: i32) -> (i32, i32) {
    %c0_i32 = arith.constant 0 : i32
    %c0_i32_0 = arith.constant 0 : i32
    return %arg0, %c0_i32 : i32, i32
  }
  func.func @transform_1(%arg0: i32, %arg1: i32) -> (i32, i32) {
    %c0_i32 = arith.constant 0 : i32
    %c0_i32_0 = arith.constant 0 : i32
    return %c0_i32, %arg1 : i32, i32
  }
  func.func @transform_2(%arg0: i32, %arg1: i32) -> (i32, i32) {
    %c0_i32 = arith.constant 0 : i32
    %c0_i32_0 = arith.constant 0 : i32
    return %c0_i32, %arg1 : i32, i32
  }
  func.func @transform_3(%arg0: i32, %arg1: i32) -> (i32, i32) {
    %c0_i32 = arith.constant 0 : i32
    return %arg0, %arg1 : i32, i32
  }
}

</mosaic_0001>

<llo_original>
// kernel: tpu_custom_call.1
$region0: #{tpu_custom_call.1}
  #allocation0 [shape = 'u32[]', space=smem, size = 0x4, offset = 0x4, fixed_abs, tag = 'smem constant byte address 0x4 - core index']
  #allocation1 [shape = 'u32[72,128]{1,0:T(1,128)}', space=vmem, size = 0x9000, scoped, tag = 'internal scratch']
  %s0 = inlined_call_operand.hbm [shape: f32[16,128], index: 0, kind: input, shape index: {}]
  %s1 = inlined_call_operand.hbm [shape: f32[128,128], index: 1, kind: input, shape index: {}]
  %s2 = inlined_call_operand.vmem [shape: f32[1,128], index: 2, kind: input, shape index: {}]
  %s3 = inlined_call_operand.hbm [shape: f32[16,128], index: 3, kind: output, shape index: {}]
  %s4 = sld [smem:[#allocation0]]
  $region30: #{tpu_custom_call.1} parent=0
    _
  %s6 = ssub.s32 1, %s4
  %s7 = scalar_select 0, %s6, %s4
  $region1: #{tpu_custom_call.1} parent=0
    #allocation2 [shape = 'u8[8192]{0}', space=vmem, size = 0x2000, scoped, tag = 'input window, operand 0, single buffered']
    #allocation3 [shape = 's32[1]{0}', space=sflag, size = 0x4, scoped, tag = 'scoped memory for tpu_custom_call.1']
    #allocation4 [shape = 's32[1]{0}', space=sflag, size = 0x4, scoped, tag = 'scoped memory for tpu_custom_call.1']
    #allocation5 [shape = 'u8[65536]{0}', space=vmem, size = 0x10000, scoped, tag = 'input window, operand 1, single buffered']
    #allocation6 [shape = 's32[1]{0}', space=sflag, size = 0x4, scoped, tag = 'scoped memory for tpu_custom_call.1']
    #allocation7 [shape = 'u8[8192]{0}', space=vmem, size = 0x2000, scoped, tag = 'output window, operand 0, single buffered']
    %8 = vsyncpa [#allocation3], 0
    %9 = vsyncpa [#allocation6], 0
    %10 = vsyncpa [#allocation4], 0
    // Predicated region
    $region2: #{tpu_custom_call.1} parent=1 // pred_check
      _
    $region3: #{tpu_custom_call.1} parent=1 // pred_check_branch
      %12 = sbr.rel (0) target = $region5
    $region4: #{tpu_custom_call.1} parent=1 // pred_region
      %14 = vsyncadd [#allocation3], 0
      %s15 = sshll.u32 %s0, 4
      %s16 = int_to_ptr.hbm [resolvable:$true] %s15
      %s17 = sshll.u32 [#allocation2], 4
      %s18 = int_to_ptr.vmem [resolvable:$true] %s17
      %23 = dma.hbm_to_vmem [thread:$0]  %s16, 256, %s18, [#allocation3], 128, 128, 8
    $region5: #{tpu_custom_call.1} parent=1 // pred_fallthru
      _
    // Predicated region
    $region6: #{tpu_custom_call.1} parent=1 // pred_check
      _
    $region7: #{tpu_custom_call.1} parent=1 // pred_check_branch
      %25 = sbr.rel (0) target = $region9
    $region8: #{tpu_custom_call.1} parent=1 // pred_region
      %27 = vsyncadd [#allocation6], 0
      %s28 = sshll.u32 %s1, 4
      %s29 = int_to_ptr.hbm [resolvable:$true] %s28
      %s30 = sshll.u32 [#allocation5], 4
      %s31 = int_to_ptr.vmem [resolvable:$true] %s30
      %36 = dma.hbm_to_vmem [thread:$0]  %s29, 2048, %s31, [#allocation6], 128, 128, 8
    $region9: #{tpu_custom_call.1} parent=1 // pred_fallthru
      _
    // Predicated region
    $region10: #{tpu_custom_call.1} parent=1 // pred_check
      _
    $region11: #{tpu_custom_call.1} parent=1 // pred_check_branch
      %38 = sbr.rel (0) target = $region13
    $region12: #{tpu_custom_call.1} parent=1 // pred_region
      _
    $region13: #{tpu_custom_call.1} parent=1 // pred_fallthru
      _
    // Predicated region
    $region14: #{tpu_custom_call.1} parent=1 // pred_check
      _
    $region15: #{tpu_custom_call.1} parent=1 // pred_check_branch
      %40 = sbr.rel (0) target = $region17
    $region16: #{tpu_custom_call.1} parent=1 // pred_region
      %42 = dma.done [#allocation3], 256
    $region17: #{tpu_custom_call.1} parent=1 // pred_fallthru
      _
    // Predicated region
    $region18: #{tpu_custom_call.1} parent=1 // pred_check
      _
    $region19: #{tpu_custom_call.1} parent=1 // pred_check_branch
      %44 = sbr.rel (0) target = $region21
    $region20: #{tpu_custom_call.1} parent=1 // pred_region
      %46 = dma.done [#allocation6], 2048
    $region21: #{tpu_custom_call.1} parent=1 // pred_fallthru
      _
    %v47 = vld [vmem:[#allocation2] sm:$0xff]
    %v48 = vld [vmem:[#allocation2 + $0x8] sm:$0xff]
    %v49 = vld [vmem:[#allocation5] sm:$0xff]
    %v50 = vld [vmem:[#allocation5 + $0x8] sm:$0xff]
    %v51 = vld [vmem:[#allocation5 + $0x10] sm:$0xff]
    %v52 = vld [vmem:[#allocation5 + $0x18] sm:$0xff]
    %v53 = vld [vmem:[#allocation5 + $0x20] sm:$0xff]
    %v54 = vld [vmem:[#allocation5 + $0x28] sm:$0xff]
    %v55 = vld [vmem:[#allocation5 + $0x30] sm:$0xff]
    %v56 = vld [vmem:[#allocation5 + $0x38] sm:$0xff]
    %v57 = vld [vmem:[#allocation5 + $0x40] sm:$0xff]
    %v58 = vld [vmem:[#allocation5 + $0x48] sm:$0xff]
    %v59 = vld [vmem:[#allocation5 + $0x50] sm:$0xff]
    %v60 = vld [vmem:[#allocation5 + $0x58] sm:$0xff]
    %v61 = vld [vmem:[#allocation5 + $0x60] sm:$0xff]
    %v62 = vld [vmem:[#allocation5 + $0x68] sm:$0xff]
    %v63 = vld [vmem:[#allocation5 + $0x70] sm:$0xff]
    %v64 = vld [vmem:[#allocation5 + $0x78] sm:$0xff]
    %v65 = vld [vmem:[%s2] sm:$0x1]
    %v67 = vperm.slane %v65, 0
    %69 = vmatpush.msra.mxu0 %v64
    %70 = vmatpush.msra.mxu0 %v63
    %71 = vmatpush.msra.mxu0 %v62
    %72 = vmatpush.msra.mxu0 %v61
    %73 = vmatpush.msra.mxu0 %v60
    %74 = vmatpush.msra.mxu0 %v59
    %75 = vmatpush.msra.mxu0 %v58
    %76 = vmatpush.msra.mxu0 %v57
    %77 = vmatpush.msra.mxu0 %v56
    %78 = vmatpush.msra.mxu0 %v55
    %79 = vmatpush.msra.mxu0 %v54
    %80 = vmatpush.msra.mxu0 %v53
    %81 = vmatpush.msra.mxu0 %v52
    %82 = vmatpush.msra.mxu0 %v51
    %83 = vmatpush.msra.mxu0 %v50
    %84 = vmatpush.msra.mxu0 %v49
    %85 = vmatmul.f32.gmra.mxu0 %v47
    %v86 = vpop.f32.mrf.mxu0
    %v87 = vadd.f32 %v67, %v86
    %88 = vmatmul.f32.gmra.mxu0 %v48
    %v89 = vpop.f32.mrf.mxu0
    %v90 = vadd.f32 %v67, %v89
    %91 = vdwg.mxu0
    %92 = vst [vmem:[#allocation7] sm:$0xff] %v87
    %93 = vst [vmem:[#allocation7 + $0x8] sm:$0xff] %v90
    // Predicated region
    $region22: #{tpu_custom_call.1} parent=1 // pred_check
      _
    $region23: #{tpu_custom_call.1} parent=1 // pred_check_branch
      %95 = sbr.rel (0) target = $region25
    $region24: #{tpu_custom_call.1} parent=1 // pred_region
      %97 = vsyncadd [#allocation4], 0
      %s98 = sshll.u32 [#allocation7], 4
      %s99 = int_to_ptr.vmem [resolvable:$true] %s98
      %s100 = sshll.u32 %s3, 4
      %s101 = int_to_ptr.hbm [resolvable:$true] %s100
      %106 = dma.vmem_to_hbm [thread:$0]  %s99, 256, %s101, [#allocation4], 128, 128, 8
    $region25: #{tpu_custom_call.1} parent=1 // pred_fallthru
      _
    // Predicated region
    $region26: #{tpu_custom_call.1} parent=1 // pred_check
      _
    $region27: #{tpu_custom_call.1} parent=1 // pred_check_branch
      %108 = sbr.rel (0) target = $region29
    $region28: #{tpu_custom_call.1} parent=1 // pred_region
      %110 = dma.done [#allocation4], 256
    $region29: #{tpu_custom_call.1} parent=1 // pred_fallthru
      _
    %111 = vsyncpa [#allocation3], 1
    %112 = vsyncpa [#allocation6], 1
    %113 = vsyncpa [#allocation4], 1

</llo_original>
